<compile_context>
chip_gen: v7x
topology: tpu7x:2x2x1
jax: 0.10.0
libtpu: 0.0.40
codegen_flags: <defaults>
</compile_context>

<pallas_src>
import functools

import jax
import jax.numpy as jnp
from jax.experimental import pallas as pl
from jax.experimental.pallas import tpu as pltpu


def _classifier_kernel(x_ref, w_ref, o_ref, acc_ref, *, inv_hw):
    # x_ref:   (b_tile, C, hw_chunk)  NCHW-flattened activation chunk (HW lane-dense)
    # w_ref:   (n_pad, C)             fc weight, PyTorch layout, resident in VMEM
    # o_ref:   (b_tile, n_pad)        logits (class dim padded to a lane multiple)
    # acc_ref: (b_tile, C) f32        pooled spatial-sum accumulator
    hw_i = pl.program_id(1)

    @pl.when(hw_i == 0)
    def _():
        acc_ref[...] = jnp.zeros_like(acc_ref)

    # Partial spatial sum in f32 (cross-lane reduce on the XLU; kernel is HBM-bound).
    acc_ref[...] += jnp.sum(x_ref[...], axis=-1, dtype=jnp.float32)

    @pl.when(hw_i == pl.num_programs(1) - 1)
    def _():
        # Global-average scale applied once to the small pooled tensor (total H*W).
        pooled = acc_ref[...] * jnp.float32(inv_hw)            # (b_tile, C)
        # pooled (b_tile, C) @ weight (n_pad, C), contracting on C -> (b_tile, n_pad)
        out = jax.lax.dot_general(
            pooled,
            w_ref[...].astype(jnp.float32),
            dimension_numbers=(((1,), (1,)), ((), ())),
            preferred_element_type=jnp.float32,
        )
        o_ref[...] = out.astype(o_ref.dtype)


def _pick_tile(total, target, align):
    """Largest exact divisor of `total` that is <= target and a multiple of `align`;
    falls back to the full extent (block == full dim is always legal)."""
    best = None
    upper = min(total, max(target, align))
    d = align
    while d <= upper:
        if total % d == 0:
            best = d
        d += align
    return best if best is not None else total


def classifier_forward(x, fc_weight, *, b_tile=None, hw_chunk=None):
    """x: (B, C, H, W) NCHW; fc_weight: (num_classes, C) — PyTorch nn.Linear layout."""
    B, C, H, W = x.shape
    N = fc_weight.shape[0]
    HW = H * W

    # Free contiguous view: (B, C, H, W) -> (B, C, H*W); HW is the lane-dense dim.
    x3 = x.reshape(B, C, HW)

    # Pad the class dim to a multiple of 128 for lane-dense (unmasked) output stores.
    n_pad = max(128, ((N + 127) // 128) * 128)
    w = fc_weight
    if n_pad != N:
        w = jnp.pad(w, ((0, n_pad - N), (0, 0)))

    itemsize = jnp.dtype(x.dtype).itemsize
    w_itemsize = jnp.dtype(w.dtype).itemsize

    # Tile selection (exact divisors only -> no partial blocks in the reduction).
    if b_tile is None:
        b_tile = _pick_tile(B, 128, 8)          # second-minor of output block: 8-aligned or full B
    if hw_chunk is None:
        budget_in = 8 * 1024 * 1024             # bytes per (single-buffered) x block
        c_pad8 = ((C + 7) // 8) * 8
        hw_target = max(128, budget_in // max(1, b_tile * c_pad8 * itemsize))
        hw_chunk = _pick_tile(HW, hw_target, 128)   # lane dim: multiple of 128 or full HW

    grid = (pl.cdiv(B, b_tile), pl.cdiv(HW, hw_chunk))

    # Explicit VMEM budget (with sublane/lane padding): double-buffered x + weight
    # + double-buffered output + accumulator.
    c_pad8 = ((C + 7) // 8) * 8
    c_pad128 = ((C + 127) // 128) * 128
    vmem_need = (2 * b_tile * c_pad8 * hw_chunk * itemsize
                 + 2 * n_pad * c_pad128 * w_itemsize
                 + 2 * b_tile * n_pad * itemsize
                 + ((b_tile + 7) // 8) * 8 * c_pad128 * 4)
    vmem_limit = int(min(max(2 * vmem_need, 16 * 1024 * 1024), 48 * 1024 * 1024))

    cost = pl.CostEstimate(
        flops=B * HW * C + 2 * B * C * n_pad,
        transcendentals=0,
        bytes_accessed=(x3.size * itemsize
                        + w.size * w_itemsize
                        + B * n_pad * itemsize),
    )

    kernel = functools.partial(_classifier_kernel, inv_hw=1.0 / HW)

    out_padded = pl.pallas_call(
        kernel,
        out_shape=jax.ShapeDtypeStruct((B, n_pad), x.dtype),
        grid_spec=pltpu.PrefetchScalarGridSpec(
            num_scalar_prefetch=0,
            grid=grid,
            in_specs=[
                pl.BlockSpec((b_tile, C, hw_chunk), lambda b, h: (b, 0, h)),
                pl.BlockSpec((n_pad, C), lambda b, h: (0, 0)),   # weight resident
            ],
            out_specs=pl.BlockSpec((b_tile, n_pad), lambda b, h: (b, 0)),
            scratch_shapes=[pltpu.VMEM((b_tile, C), jnp.float32)],
        ),
        compiler_params=pltpu.CompilerParams(
            dimension_semantics=("parallel", "arbitrary"),
            vmem_limit_bytes=vmem_limit,
        ),
        cost_estimate=cost,
    )(x3, w)

    return out_padded[:, :N]


if __name__ == "__main__":
    key = jax.random.PRNGKey(0)
    kx, kw = jax.random.split(key)

    B, C, H, W = 2, 4, 16, 16        # in_features = C = 4
    num_classes = 8

    x = jax.random.normal(kx, (B, C, H, W), dtype=jnp.float32)
    # PyTorch layout (num_classes, in_features)
    fc_weight = jax.random.normal(kw, (num_classes, C), dtype=jnp.float32) * 0.1

    # Pure-JAX reference (global avg pool + linear, no bias)
    ref = jnp.mean(x, axis=(2, 3)) @ fc_weight.T

    # Default tiling (single HW chunk at this small size)
    out = jax.block_until_ready(classifier_forward(x, fc_weight))
    assert out.shape == (B, num_classes)
    assert jnp.allclose(out, ref, atol=1e-5, rtol=1e-5)

    # Forced multi-chunk reduction to exercise the gridded accumulation path
    out2 = jax.block_until_ready(classifier_forward(x, fc_weight, hw_chunk=128))
    assert out2.shape == (B, num_classes)
    assert jnp.allclose(out2, ref, atol=1e-5, rtol=1e-5)

    print("KERNEL_OK")
</pallas_src>

<mosaic_0001>
module attributes {stable_mosaic.version = 11 : i64} {
  func.func @_classifier_kernel(%arg0: i32, %arg1: i32, %arg2: memref<2x4x256xf32, #tpu.memory_space<vmem>>, %arg3: memref<128x4xf32, #tpu.memory_space<vmem>>, %arg4: memref<2x128xf32, #tpu.memory_space<vmem>>, %arg5: memref<2x4xf32, #tpu.memory_space<vmem>>) attributes {dimension_semantics = [#tpu.dimension_semantics<parallel>, #tpu.dimension_semantics<arbitrary>], iteration_bounds = array<i64: 1, 1>, scalar_prefetch = 0 : i64, scratch_operands = 1 : i64, tpu.core_type = #tpu.core_type<tc>, window_params = [{transform_indices = @transform_0, window_bounds = array<i64: 2, 4, 256>}, {pipeline_mode = #tpu.pipeline_mode<synchronous>, transform_indices = @transform_1, window_bounds = array<i64: 128, 4>}, {transform_indices = @transform_2, window_bounds = array<i64: 2, 128>}]} {
    %c0_i32 = arith.constant 0 : i32
    %0 = arith.cmpi eq, %arg1, %c0_i32 : i32
    %1 = arith.extui %0 : i1 to i32
    %c0_i32_0 = arith.constant 0 : i32
    %2 = arith.cmpi ne, %1, %c0_i32_0 : i32
    scf.if %2 {
      %cst_9 = arith.constant 0.000000e+00 : f32
      %11 = vector.broadcast %cst_9 : f32 to vector<2x4xf32>
      %c0_10 = arith.constant 0 : index
      %c0_11 = arith.constant 0 : index
      %12 = vector.load %arg5[%c0_10, %c0_11] : memref<2x4xf32, #tpu.memory_space<vmem>>, vector<2x4xf32>
      tpu.vector_store %arg5[%c0_10, %c0_11], %11 {strides = array<i32>} : memref<2x4xf32, #tpu.memory_space<vmem>>, vector<2x4xf32>,
    } else {
    }
    %c0 = arith.constant 0 : index
    %c0_1 = arith.constant 0 : index
    %3 = vector.load %arg5[%c0, %c0_1] : memref<2x4xf32, #tpu.memory_space<vmem>>, vector<2x4xf32>
    %c0_2 = arith.constant 0 : index
    %c0_3 = arith.constant 0 : index
    %c0_4 = arith.constant 0 : index
    %4 = vector.load %arg2[%c0_2, %c0_3, %c0_4] : memref<2x4x256xf32, #tpu.memory_space<vmem>>, vector<2x4x256xf32>
    %cst = arith.constant dense<0.000000e+00> : vector<2x4xf32>
    %5 = vector.multi_reduction <add>, %4, %cst [2] : vector<2x4x256xf32> to vector<2x4xf32>
    %6 = arith.addf %3, %5 : vector<2x4xf32>
    %c0_5 = arith.constant 0 : index
    %c0_6 = arith.constant 0 : index
    %7 = vector.load %arg5[%c0_5, %c0_6] : memref<2x4xf32, #tpu.memory_space<vmem>>, vector<2x4xf32>
    tpu.vector_store %arg5[%c0_5, %c0_6], %6 {strides = array<i32>} : memref<2x4xf32, #tpu.memory_space<vmem>>, vector<2x4xf32>,
    %c0_i32_7 = arith.constant 0 : i32
    %8 = arith.cmpi eq, %arg1, %c0_i32_7 : i32
    %9 = arith.extui %8 : i1 to i32
    %c0_i32_8 = arith.constant 0 : i32
    %10 = arith.cmpi ne, %9, %c0_i32_8 : i32
    scf.if %10 {
      %c0_9 = arith.constant 0 : index
      %c0_10 = arith.constant 0 : index
      %11 = vector.load %arg5[%c0_9, %c0_10] : memref<2x4xf32, #tpu.memory_space<vmem>>, vector<2x4xf32>
      %cst_11 = arith.constant 3.906250e-03 : f32
      %12 = vector.broadcast %cst_11 : f32 to vector<2x4xf32>
      %13 = arith.mulf %11, %12 : vector<2x4xf32>
      %c0_12 = arith.constant 0 : index
      %c0_13 = arith.constant 0 : index
      %14 = vector.load %arg3[%c0_12, %c0_13] : memref<128x4xf32, #tpu.memory_space<vmem>>, vector<128x4xf32>
      %cst_14 = arith.constant dense<0.000000e+00> : vector<2x128xf32>
      %15 = tpu.matmul %13, %14, %cst_14 {dimension_numbers = #tpu.dot_dimension_numbers<[1], [1], [0], [0], [0, 0, 1, 0], [], []>} : vector<2x4xf32>, vector<128x4xf32>, vector<2x128xf32> -> vector<2x128xf32>
      %c0_15 = arith.constant 0 : index
      %c0_16 = arith.constant 0 : index
      %16 = vector.load %arg4[%c0_15, %c0_16] : memref<2x128xf32, #tpu.memory_space<vmem>>, vector<2x128xf32>
      tpu.vector_store %arg4[%c0_15, %c0_16], %15 {strides = array<i32>} : memref<2x128xf32, #tpu.memory_space<vmem>>, vector<2x128xf32>,
    } else {
    }
    return
  }
  func.func @transform_0(%arg0: i32, %arg1: i32) -> (i32, i32, i32) {
    %c0_i32 = arith.constant 0 : i32
    %c0_i32_0 = arith.constant 0 : i32
    return %arg0, %c0_i32, %arg1 : i32, i32, i32
  }
  func.func @transform_1(%arg0: i32, %arg1: i32) -> (i32, i32) {
    %c0_i32 = arith.constant 0 : i32
    %c0_i32_0 = arith.constant 0 : i32
    %c0_i32_1 = arith.constant 0 : i32
    return %c0_i32, %c0_i32_0 : i32, i32
  }
  func.func @transform_2(%arg0: i32, %arg1: i32) -> (i32, i32) {
    %c0_i32 = arith.constant 0 : i32
    %c0_i32_0 = arith.constant 0 : i32
    return %arg0, %c0_i32 : i32, i32
  }
}

</mosaic_0001>

<llo_original>
// kernel: tpu_custom_call.1
$region0: #{tpu_custom_call.1}
  #allocation0 [shape = 'u32[]', space=smem, size = 0x4, offset = 0x4, fixed_abs, tag = 'smem constant byte address 0x4 - core index']
  #allocation1 [shape = 'u32[144,128]{1,0:T(1,128)}', space=vmem, size = 0x12000, scoped, tag = 'internal scratch']
  #allocation2 [shape = 'f32[2,4]{1,0:T(2,128)}', space=vmem, size = 0x400, scoped, tag = 'scratch operand']
  %s0 = inlined_call_operand.vmem [shape: f32[2,4,256], index: 0, kind: input, shape index: {}]
  %s1 = inlined_call_operand.vmem [shape: f32[128,4], index: 1, kind: input, shape index: {}]
  %s2 = inlined_call_operand.hbm [shape: f32[2,128], index: 2, kind: output, shape index: {}]
  %s3 = sld [smem:[#allocation0]]
  $region26: #{tpu_custom_call.1} parent=0
    _
  %s5 = ssub.s32 1, %s3
  %s6 = scalar_select 0, %s5, %s3
  $region1: #{tpu_custom_call.1} parent=0
    #allocation3 [shape = 'u8[1024]{0}', space=vmem, size = 0x400, scoped, tag = 'output window, operand 0, single buffered']
    #allocation4 [shape = 's32[1]{0}', space=sflag, size = 0x4, scoped, tag = 'scoped memory for tpu_custom_call.1']
    %7 = vsyncpa [#allocation4], 0
    // Predicated region
    $region2: #{tpu_custom_call.1} parent=1 // pred_check
      _
    $region3: #{tpu_custom_call.1} parent=1 // pred_check_branch
      %9 = sbr.rel (0) target = $region5
    $region4: #{tpu_custom_call.1} parent=1 // pred_region
      _
    $region5: #{tpu_custom_call.1} parent=1 // pred_fallthru
      _
    // Predicated region
    $region6: #{tpu_custom_call.1} parent=1 // pred_check
      _
    $region7: #{tpu_custom_call.1} parent=1 // pred_check_branch
      %11 = sbr.rel (0) target = $region9
    $region8: #{tpu_custom_call.1} parent=1 // pred_region
      _
    $region9: #{tpu_custom_call.1} parent=1 // pred_fallthru
      _
    %p12 = scmp.eq.s32.totalorder 0, 0
    // Predicated region
    $region10: #{tpu_custom_call.1} parent=1 // pred_check
      %p13 = pneg %p12
    $region11: #{tpu_custom_call.1} parent=1 // pred_check_branch
      %15 = sbr.rel (%p13) target = $region13
    $region12: #{tpu_custom_call.1} parent=1 // pred_region
      %vm16 = vcmask 25600
      %17 = vst.msk [vmem:[#allocation2] sm:$0x3] %vm16, 0.0
    $region13: #{tpu_custom_call.1} parent=1 // pred_fallthru
      _
    %v18 = vld [vmem:[#allocation2] sm:$0x3]
    %v19 = vld [vmem:[%s0] sm:$0xff]
    %v20 = vld [vmem:[%s0 + $0x8] sm:$0xff]
    %v23 = vcombine.high %v19, %v19
    %v24 = vcombine.high %v20, %v20
    %vm27 = vcmask 1043456
    %v28 = vsel %vm27, %v19, 0.0
    %v29 = vsel %vm27, %v23, 0.0
    %v30 = vadd.f32 %v28, %v29
    %31 = vadd.xlane.f32.xlu0 %v30
    %v32 = vpop.xlane.xlu0 %31
    %v33 = vsel %vm27, %v20, 0.0
    %v34 = vsel %vm27, %v24, 0.0
    %v35 = vadd.f32 %v33, %v34
    %36 = vadd.xlane.f32.xlu0 %v35
    %v37 = vpop.xlane.xlu0 %36
    %v40 = vlaneseq
    %v41 = vand.u32 %v40, 127
    %v42 = vlaneseq
    %v43 = vshrl.u32 %v42, 7
    %v44 = vsub.s32 %v41, %v43
    %v45 = vrot.slane %v32, %v44
    %v46 = vlaneseq
    %v47 = vshrl.u32 %v46, 7
    %v48 = vsub.s32 %v41, %v47
    %v49 = vrot.slane %v37, %v48
    %vm50 = vcmask 1041409
    %v51 = vsel %vm50, %v49, %v45
    %v53 = vadd.f32 %v18, %v51
    %vm54 = vcmask 25600
    %55 = vst.msk [vmem:[#allocation2] sm:$0x3] %vm54, %v53
    // Predicated region
    $region14: #{tpu_custom_call.1} parent=1 // pred_check
      %p56 = pneg %p12
    $region15: #{tpu_custom_call.1} parent=1 // pred_check_branch
      %58 = sbr.rel (%p56) target = $region17
    $region16: #{tpu_custom_call.1} parent=1 // pred_region
      %v59 = vld [vmem:[#allocation2] sm:$0x3]
      %v60 = vmul.f32 %v59, 0.00390625
      %v61 = vld [vmem:[%s1] sm:$0xff]
      %v62 = vld [vmem:[%s1 + $0x8] sm:$0xff]
      %v63 = vld [vmem:[%s1 + $0x10] sm:$0xff]
      %v64 = vld [vmem:[%s1 + $0x18] sm:$0xff]
      %v65 = vld [vmem:[%s1 + $0x20] sm:$0xff]
      %v66 = vld [vmem:[%s1 + $0x28] sm:$0xff]
      %v67 = vld [vmem:[%s1 + $0x30] sm:$0xff]
      %v68 = vld [vmem:[%s1 + $0x38] sm:$0xff]
      %v69 = vld [vmem:[%s1 + $0x40] sm:$0xff]
      %v70 = vld [vmem:[%s1 + $0x48] sm:$0xff]
      %v71 = vld [vmem:[%s1 + $0x50] sm:$0xff]
      %v72 = vld [vmem:[%s1 + $0x58] sm:$0xff]
      %v73 = vld [vmem:[%s1 + $0x60] sm:$0xff]
      %v74 = vld [vmem:[%s1 + $0x68] sm:$0xff]
      %v75 = vld [vmem:[%s1 + $0x70] sm:$0xff]
      %v76 = vld [vmem:[%s1 + $0x78] sm:$0xff]
      %vm77 = vcmask 31744
      %v79 = vsel %vm77, %v60, 0
      %v82 = vsel %vm77, %v61, 0
      %v85 = vsel %vm77, %v62, 0
      %v88 = vsel %vm77, %v63, 0
      %v91 = vsel %vm77, %v64, 0
      %v94 = vsel %vm77, %v65, 0
      %v97 = vsel %vm77, %v66, 0
      %v100 = vsel %vm77, %v67, 0
      %v103 = vsel %vm77, %v68, 0
      %v106 = vsel %vm77, %v69, 0
      %v109 = vsel %vm77, %v70, 0
      %v112 = vsel %vm77, %v71, 0
      %v115 = vsel %vm77, %v72, 0
      %v118 = vsel %vm77, %v73, 0
      %v121 = vsel %vm77, %v74, 0
      %v124 = vsel %vm77, %v75, 0
      %v127 = vsel %vm77, %v76, 0
      %129 = vmatprep.subr.mxu0 0.0
      %130 = vmatpush1.xpose.msra.mxu0 %v82
      %131 = vmatprep.subr.mxu0 0.0
      %132 = vmatpush1.xpose.msra.mxu0 %v85
      %133 = vmatprep.subr.mxu0 0.0
      %134 = vmatpush1.xpose.msra.mxu0 %v88
      %135 = vmatprep.subr.mxu0 0.0
      %136 = vmatpush1.xpose.msra.mxu0 %v91
      %137 = vmatprep.subr.mxu0 0.0
      %138 = vmatpush1.xpose.msra.mxu0 %v94
      %139 = vmatprep.subr.mxu0 0.0
      %140 = vmatpush1.xpose.msra.mxu0 %v97
      %141 = vmatprep.subr.mxu0 0.0
      %142 = vmatpush1.xpose.msra.mxu0 %v100
      %143 = vmatprep.subr.mxu0 0.0
      %144 = vmatpush1.xpose.msra.mxu0 %v103
      %145 = vmatprep.subr.mxu0 0.0
      %146 = vmatpush1.xpose.msra.mxu0 %v106
      %147 = vmatprep.subr.mxu0 0.0
      %148 = vmatpush1.xpose.msra.mxu0 %v109
      %149 = vmatprep.subr.mxu0 0.0
      %150 = vmatpush1.xpose.msra.mxu0 %v112
      %151 = vmatprep.subr.mxu0 0.0
      %152 = vmatpush1.xpose.msra.mxu0 %v115
      %153 = vmatprep.subr.mxu0 0.0
      %154 = vmatpush1.xpose.msra.mxu0 %v118
      %155 = vmatprep.subr.mxu0 0.0
      %156 = vmatpush1.xpose.msra.mxu0 %v121
      %157 = vmatprep.subr.mxu0 0.0
      %158 = vmatpush1.xpose.msra.mxu0 %v124
      %159 = vmatprep.subr.mxu0 0.0
      %160 = vmatpush1.xpose.msra.mxu0 %v127
      %161 = vmatprep.subr.mxu0 0.0
      %162 = vmatpush1.xpose.msra.mxu0 0.0
      %163 = vmatprep.subr.mxu0 0.0
      %164 = vmatpush1.xpose.msra.mxu0 0.0
      %165 = vmatprep.subr.mxu0 0.0
      %166 = vmatpush1.xpose.msra.mxu0 0.0
      %167 = vmatprep.subr.mxu0 0.0
      %168 = vmatpush1.xpose.msra.mxu0 0.0
      %169 = vmatprep.subr.mxu0 0.0
      %170 = vmatpush1.xpose.msra.mxu0 0.0
      %171 = vmatprep.subr.mxu0 0.0
      %172 = vmatpush1.xpose.msra.mxu0 0.0
      %173 = vmatprep.subr.mxu0 0.0
      %174 = vmatpush1.xpose.msra.mxu0 0.0
      %175 = vmatprep.subr.mxu0 0.0
      %176 = vmatpush1.xpose.msra.mxu0 0.0
      %177 = vmatprep.subr.mxu0 0.0
      %178 = vmatpush1.xpose.msra.mxu0 0.0
      %179 = vmatprep.subr.mxu0 0.0
      %180 = vmatpush1.xpose.msra.mxu0 0.0
      %181 = vmatprep.subr.mxu0 0.0
      %182 = vmatpush1.xpose.msra.mxu0 0.0
      %183 = vmatprep.subr.mxu0 0.0
      %184 = vmatpush1.xpose.msra.mxu0 0.0
      %185 = vmatprep.subr.mxu0 0.0
      %186 = vmatpush1.xpose.msra.mxu0 0.0
      %187 = vmatprep.subr.mxu0 0.0
      %188 = vmatpush1.xpose.msra.mxu0 0.0
      %189 = vmatprep.subr.mxu0 0.0
      %190 = vmatpush1.xpose.msra.mxu0 0.0
      %191 = vmatprep.subr.mxu0 0.0
      %192 = vmatpush1.xpose.msra.mxu0 0.0
      %193 = vmatprep.mubr.f32.mxu0 0.0
      %194 = vmatmul.mubr.f32.gmra.mrb[0].mxu0 %v79
      %v195 = vpop.f32.mrb[0].mxu0
      %v196 = vadd.f32 0.0, %v195
      %v197 = vpop.f32.mrb[0].mxu0
      %198 = vdwg.mxu0
      %199 = vst [vmem:[#allocation3] sm:$0x3] %v196
    $region17: #{tpu_custom_call.1} parent=1 // pred_fallthru
      _
    // Predicated region
    $region18: #{tpu_custom_call.1} parent=1 // pred_check
      _
    $region19: #{tpu_custom_call.1} parent=1 // pred_check_branch
      %201 = sbr.rel (0) target = $region21
    $region20: #{tpu_custom_call.1} parent=1 // pred_region
      %s203 = ssub.s32 32, 32
      %204 = vsyncadd [#allocation4], %s203
      %s206 = sshll.u32 [#allocation3], 4
      %s207 = int_to_ptr.vmem [resolvable:$true] %s206
      %209 = dma.vmem_to_hbm [thread:$0]  %s207, 32, %s2, [#allocation4]
    $region21: #{tpu_custom_call.1} parent=1 // pred_fallthru
      _
    // Predicated region
    $region22: #{tpu_custom_call.1} parent=1 // pred_check
      _
    $region23: #{tpu_custom_call.1} parent=1 // pred_check_branch
      %211 = sbr.rel (0) target = $region25
    $region24: #{tpu_custom_call.1} parent=1 // pred_region
      %212 = dma.done [#allocation4], 32
    $region25: #{tpu_custom_call.1} parent=1 // pred_fallthru
      _
    %213 = vsyncpa [#allocation4], 1

</llo_original>
